<compile_context>
chip_gen: v7x
topology: tpu7x:2x2x1
jax: 0.10.0
libtpu: 0.0.40
codegen_flags: <defaults>
</compile_context>

<pallas_src>
import jax
import jax.numpy as jnp
from jax import lax
from jax.experimental import pallas as pl
from jax.experimental.pallas import tpu as pltpu


def _round_up(a, b):
    return ((a + b - 1) // b) * b


def _cdiv(a, b):
    return (a + b - 1) // b


def _make_ltc_kernel(HP, H, integrate):
    """HP: lane-padded hidden (multiple of 128); H: true hidden size."""
    inv_h = 1.0 / float(H)

    def kernel(sin_ref, dt_ref, h0_ref, x_ref, wh_ref, wx_ref, vec_ref,
               out_ref, h_s, zx_s):
        # sin_ref : SMEM (S,)  f32  sin(t_k) per time step
        # dt_ref  : SMEM (S,)  f32  step sizes (unused in forward mode)
        # h0_ref  : (TB, HP)   f32  initial state tile (zero lane pads)
        # x_ref   : (TB, I)    f32  x_base tile
        # wh_ref  : (HP, 2HP)  bf16 [W_rec^T | W_gate^T]   (zero pad rows/cols)
        # wx_ref  : (I,  HP)   bf16 W_in^T                 (zero pad cols)
        # vec_ref : (4, HP)    f32  [b_in; exp(-log_tau); gamma; beta]
        # h_s     : (TB, HP)   f32  carried state
        # zx_s    : (TB, HP)   f32  x_base @ W_in^T (time-invariant part)
        k = pl.program_id(1)
        n_steps = pl.num_programs(1)

        @pl.when(k == 0)
        def _():
            h_s[...] = h0_ref[...].astype(jnp.float32)
            # Input projection of the time-invariant x_base: one MXU push per
            # batch tile, reused (scaled by sin(t_k)) across all time steps.
            zx_s[...] = jnp.dot(x_ref[...].astype(jnp.bfloat16), wx_ref[...],
                                preferred_element_type=jnp.float32)

        # Cheap VMEM reads; re-done each grid step by construction of the grid.
        b_in = vec_ref[0:1, :]
        inv_tau = vec_ref[1:2, :]
        gamma = vec_ref[2:3, :]
        beta = vec_ref[3:4, :]

        h = h_s[...]
        # Single MXU push covers both the recurrent pre-activation and the
        # gate pre-activation (f32 accumulation).
        z = jnp.dot(h.astype(jnp.bfloat16), wh_ref[...],
                    preferred_element_type=jnp.float32)          # (TB, 2*HP)

        sin_t = sin_ref[k]
        pre = z[:, :HP] + sin_t * zx_s[...] + b_in
        # sigmoid via tanh identity: one EUP push instead of exp + reciprocal.
        g = 0.5 * jnp.tanh(0.5 * z[:, HP:]) + 0.5
        dh = (g * jnp.tanh(pre) - h) * inv_tau                   # pads stay 0

        # Single-pass LayerNorm statistics over the true hidden size
        # (padded lanes contribute exactly 0 to both sums).
        s1 = jnp.sum(dh, axis=-1, keepdims=True)
        s2 = jnp.sum(dh * dh, axis=-1, keepdims=True)
        mean = s1 * inv_h
        var = s2 * inv_h - mean * mean
        inv = lax.rsqrt(var + 1e-5)                              # torch LN eps
        y = (dh - mean) * inv * gamma + beta                     # pads stay 0

        if integrate:
            # Fused explicit-Euler step of dh/dt = LayerNorm(LTC derivative).
            h_new = h + dt_ref[k] * y
            h_s[...] = h_new

            @pl.when(k == n_steps - 1)
            def _():
                out_ref[...] = h_new.astype(out_ref.dtype)
        else:
            out_ref[...] = y.astype(out_ref.dtype)

    return kernel


def prepare_ltcode_params(params, input_size, hidden_size):
    """One-time parameter preparation: transpose/fuse/pad/cast the weights."""
    I, H = input_size, hidden_size
    assert H % 64 == 0, "Hidden size must be multiple of 64"   # module BLOCK_SIZE
    HP = _round_up(H, 128)                                     # lane-padded hidden

    # Fused recurrent weight: columns [0, HP) -> pre-activation,
    # columns [HP, 2HP) -> gate pre-activation.  Pad rows/cols are exactly 0.
    w_h = jnp.zeros((HP, 2 * HP), jnp.float32)
    w_h = w_h.at[:H, :H].set(params["w_rec"].T)
    w_h = w_h.at[:H, HP:HP + H].set(params["w_gate"].T)
    w_h = w_h.astype(jnp.bfloat16)

    # Input weight, contraction dim = true input size (no zero K rows).
    w_x = jnp.zeros((I, HP), jnp.float32)
    w_x = w_x.at[:, :H].set(params["w_in"].T)
    w_x = w_x.astype(jnp.bfloat16)

    def _pad(v, fill):
        v = v.astype(jnp.float32)
        if HP == H:
            return v
        return jnp.concatenate([v, jnp.full((HP - H,), fill, jnp.float32)])

    vecs = jnp.stack([
        _pad(params["b_in"], 0.0),
        _pad(jnp.exp(-params["log_tau"]), 1.0),   # precomputed 1/tau
        _pad(params["ln_w"], 0.0),                # gamma (0 on padded lanes)
        _pad(params["ln_b"], 0.0),                # beta  (0 on padded lanes)
    ])                                            # (4, HP)

    return {"w_h": w_h, "w_x": w_x, "vecs": vecs, "HP": HP, "I": I, "H": H}


def _pick_tb(B):
    # Multiple of 8 (sublane-aligned), capped at 128 (v5e spill/vst pressure),
    # and >=2 batch tiles whenever B >= 16 so v7x's second TensorCore is used.
    tb = 8 * _cdiv(_cdiv(B, 2), 8)
    return int(max(8, min(128, tb)))


def _vmem_limit_bytes(HP, I, TB):
    w_bytes = HP * (2 * HP) * 2 + I * HP * 2 + 4 * HP * 4
    tile_bytes = TB * (HP + I + HP) * 4            # h0 + x + out blocks
    scratch_bytes = 2 * TB * HP * 4
    live_bytes = 4 * TB * (2 * HP) * 4             # z / pre / dh / y temporaries
    need = 2 * (w_bytes + tile_bytes) + scratch_bytes + live_bytes
    return int(min(96 << 20, max(32 << 20, 2 * need)))


def _ltcode_call(prep, B, S, integrate, out_dtype):
    HP, I = prep["HP"], prep["I"]
    TB = _pick_tb(B)
    grid = (_cdiv(B, TB), S)

    return pl.pallas_call(
        _make_ltc_kernel(HP, prep["H"], integrate),
        out_shape=jax.ShapeDtypeStruct((B, HP), out_dtype),
        grid_spec=pltpu.PrefetchScalarGridSpec(
            num_scalar_prefetch=2,                 # sin(t_k), dt_k in SMEM
            grid=grid,
            in_specs=[
                pl.BlockSpec((TB, HP), lambda i, k, *_: (i, 0)),      # h0
                pl.BlockSpec((TB, I), lambda i, k, *_: (i, 0)),       # x_base
                pl.BlockSpec((HP, 2 * HP), lambda i, k, *_: (0, 0)),  # W_h fused
                pl.BlockSpec((I, HP), lambda i, k, *_: (0, 0)),       # W_x
                pl.BlockSpec((4, HP), lambda i, k, *_: (0, 0)),       # vectors
            ],
            out_specs=pl.BlockSpec((TB, HP), lambda i, k, *_: (i, 0)),
            scratch_shapes=[pltpu.VMEM((TB, HP), jnp.float32),        # h state
                            pltpu.VMEM((TB, HP), jnp.float32)],       # x proj
        ),
        compiler_params=pltpu.CompilerParams(
            dimension_semantics=("parallel", "arbitrary"),
            vmem_limit_bytes=_vmem_limit_bytes(HP, I, TB)),
    )


def ltcode_forward(t, h, x_base, prep):
    """Exactly LTCODE.forward(t, h) with current_input = sin(t) * x_base."""
    B, H = h.shape
    HP = prep["HP"]
    assert H == prep["H"]
    h_p = h if HP == H else jnp.pad(h, ((0, 0), (0, HP - H)))
    sin_t = jnp.sin(jnp.asarray(t, jnp.float32)).reshape(1)
    dt = jnp.zeros((1,), jnp.float32)              # unused in forward mode
    out = _ltcode_call(prep, B, 1, False, h.dtype)(
        sin_t, dt, h_p.astype(jnp.float32), x_base.astype(jnp.float32),
        prep["w_h"], prep["w_x"], prep["vecs"])
    return out[:, :H] if HP != H else out


def ltcode_integrate(ts, h0, x_base, prep):
    """Fused fixed-step Euler integration of dh/dt = LTCODE.forward(t, h)."""
    B, H = h0.shape
    HP = prep["HP"]
    S = int(ts.shape[0]) - 1
    sin_t = jnp.sin(ts[:-1]).astype(jnp.float32)
    dt = (ts[1:] - ts[:-1]).astype(jnp.float32)
    h_p = h0 if HP == H else jnp.pad(h0, ((0, 0), (0, HP - H)))
    out = _ltcode_call(prep, B, S, True, h0.dtype)(
        sin_t, dt, h_p.astype(jnp.float32), x_base.astype(jnp.float32),
        prep["w_h"], prep["w_x"], prep["vecs"])
    return out[:, :H] if HP != H else out


if __name__ == "__main__":
    # Small shapes consistent with the module: hidden_size multiple of 64.
    batch, input_size, hidden_size = 16, 32, 64

    key = jax.random.PRNGKey(0)
    k_h, k_x, k_tau, k_win, k_bin, k_wrec, k_wgate = jax.random.split(key, 7)

    h = jax.random.normal(k_h, (batch, hidden_size), dtype=jnp.float32)
    x_base = jax.random.normal(k_x, (batch, input_size), dtype=jnp.float32)
    t = jnp.float32(0.5)

    params = {
        "log_tau": jax.random.normal(k_tau, (hidden_size,), dtype=jnp.float32),
        "w_in":    jax.random.normal(k_win, (hidden_size, input_size),
                                     dtype=jnp.float32) * 0.1,
        "b_in":    jax.random.normal(k_bin, (hidden_size,), dtype=jnp.float32) * 0.1,
        "w_rec":   jax.random.normal(k_wrec, (hidden_size, hidden_size),
                                     dtype=jnp.float32) * 0.1,
        "w_gate":  jax.random.normal(k_wgate, (hidden_size, hidden_size),
                                     dtype=jnp.float32) * 0.1,
        "ln_w":    jnp.ones((hidden_size,), dtype=jnp.float32),
        "ln_b":    jnp.zeros((hidden_size,), dtype=jnp.float32),
    }

    prep = prepare_ltcode_params(params, input_size, hidden_size)

    # ------------------ single forward step (module semantics) ---------------
    fwd = jax.jit(lambda tt, hh, xx: ltcode_forward(tt, hh, xx, prep))
    out = fwd(t, h, x_base)
    jax.block_until_ready(out)

    rb = lambda a: a.astype(jnp.bfloat16).astype(jnp.float32)

    def _ln(dh):
        mu = dh.mean(-1, keepdims=True)
        var = ((dh - mu) ** 2).mean(-1, keepdims=True)
        return (dh - mu) / jnp.sqrt(var + 1e-5) * params["ln_w"] + params["ln_b"]

    # reference 1: bf16-MXU/computation-order matched reference (tight check)
    zx_ref = rb(x_base) @ rb(params["w_in"]).T
    pre_b = jnp.sin(t) * zx_ref + params["b_in"] + rb(h) @ rb(params["w_rec"]).T
    g_b = 0.5 * jnp.tanh(0.5 * (rb(h) @ rb(params["w_gate"]).T)) + 0.5
    dh_b = (g_b * jnp.tanh(pre_b) - h) * jnp.exp(-params["log_tau"])
    ref_bf16 = _ln(dh_b)
    err_bf16 = float(jnp.max(jnp.abs(out - ref_bf16)))
    assert err_bf16 < 3e-3, f"forward mismatch vs bf16-matched reference: {err_bf16}"

    # reference 2: full-f32 reference (loose semantic check)
    x = jnp.sin(t) * x_base
    pre = x @ params["w_in"].T + params["b_in"] + h @ params["w_rec"].T
    g = jax.nn.sigmoid(h @ params["w_gate"].T)
    dh = (g * jnp.tanh(pre) - h) * jnp.exp(-params["log_tau"])
    ref_f32 = _ln(dh)
    err_f32 = float(jnp.max(jnp.abs(out - ref_f32)))
    assert err_f32 < 2e-1, f"forward mismatch vs f32 reference: {err_f32}"

    # ------------------ fused time-loop (Euler) integration ------------------
    n_steps = 6
    ts = jnp.float32(0.25) + jnp.float32(0.05) * jnp.arange(n_steps + 1,
                                                            dtype=jnp.float32)
    integ = jax.jit(lambda tts, hh, xx: ltcode_integrate(tts, hh, xx, prep))
    h_final = integ(ts, h, x_base)
    jax.block_until_ready(h_final)

    # pure-JAX Euler reference with matched bf16 computation order
    h_ref = h
    for s in range(n_steps):
        pre_s = (jnp.sin(ts[s]) * zx_ref + params["b_in"]
                 + rb(h_ref) @ rb(params["w_rec"]).T)
        g_s = 0.5 * jnp.tanh(0.5 * (rb(h_ref) @ rb(params["w_gate"]).T)) + 0.5
        dh_s = (g_s * jnp.tanh(pre_s) - h_ref) * jnp.exp(-params["log_tau"])
        h_ref = h_ref + (ts[s + 1] - ts[s]) * _ln(dh_s)
    err_int = float(jnp.max(jnp.abs(h_final - h_ref)))
    assert err_int < 2e-2, f"integrate mismatch vs bf16-matched Euler: {err_int}"

    print("KERNEL_OK")
</pallas_src>

<mosaic_0001>
module attributes {stable_mosaic.version = 11 : i64} {
  func.func @kernel(%arg0: i32, %arg1: i32, %arg2: memref<1xf32, #tpu.memory_space<smem>>, %arg3: memref<1xf32, #tpu.memory_space<smem>>, %arg4: memref<8x128xf32, #tpu.memory_space<vmem>>, %arg5: memref<8x32xf32, #tpu.memory_space<vmem>>, %arg6: memref<128x256xbf16, #tpu.memory_space<vmem>>, %arg7: memref<32x128xbf16, #tpu.memory_space<vmem>>, %arg8: memref<4x128xf32, #tpu.memory_space<vmem>>, %arg9: memref<8x128xf32, #tpu.memory_space<vmem>>, %arg10: memref<8x128xf32, #tpu.memory_space<vmem>>, %arg11: memref<8x128xf32, #tpu.memory_space<vmem>>) attributes {dimension_semantics = [#tpu.dimension_semantics<parallel>, #tpu.dimension_semantics<arbitrary>], iteration_bounds = array<i64: 2, 1>, scalar_prefetch = 2 : i64, scratch_operands = 2 : i64, tpu.core_type = #tpu.core_type<tc>, window_params = [{transform_indices = @transform_0, window_bounds = array<i64: 8, 128>}, {transform_indices = @transform_1, window_bounds = array<i64: 8, 32>}, {pipeline_mode = #tpu.pipeline_mode<synchronous>, transform_indices = @transform_2, window_bounds = array<i64: 128, 256>}, {pipeline_mode = #tpu.pipeline_mode<synchronous>, transform_indices = @transform_3, window_bounds = array<i64: 32, 128>}, {pipeline_mode = #tpu.pipeline_mode<synchronous>, transform_indices = @transform_4, window_bounds = array<i64: 4, 128>}, {transform_indices = @transform_5, window_bounds = array<i64: 8, 128>}]} {
    %c0_i32 = arith.constant 0 : i32
    %0 = arith.cmpi eq, %arg1, %c0_i32 : i32
    %1 = arith.extui %0 : i1 to i32
    %c0_i32_0 = arith.constant 0 : i32
    %2 = arith.cmpi ne, %1, %c0_i32_0 : i32
    scf.if %2 {
      %c0_21 = arith.constant 0 : index
      %c0_22 = arith.constant 0 : index
      %56 = vector.load %arg4[%c0_21, %c0_22] : memref<8x128xf32, #tpu.memory_space<vmem>>, vector<8x128xf32>
      %c0_23 = arith.constant 0 : index
      %c0_24 = arith.constant 0 : index
      %57 = vector.load %arg10[%c0_23, %c0_24] : memref<8x128xf32, #tpu.memory_space<vmem>>, vector<8x128xf32>
      tpu.vector_store %arg10[%c0_23, %c0_24], %56 {strides = array<i32>} : memref<8x128xf32, #tpu.memory_space<vmem>>, vector<8x128xf32>,
      %c0_25 = arith.constant 0 : index
      %c0_26 = arith.constant 0 : index
      %58 = vector.load %arg5[%c0_25, %c0_26] : memref<8x32xf32, #tpu.memory_space<vmem>>, vector<8x32xf32>
      %59 = arith.truncf %58 : vector<8x32xf32> to vector<8x32xbf16>
      %c0_27 = arith.constant 0 : index
      %c0_28 = arith.constant 0 : index
      %60 = vector.load %arg7[%c0_27, %c0_28] : memref<32x128xbf16, #tpu.memory_space<vmem>>, vector<32x128xbf16>
      %cst_29 = arith.constant dense<0.000000e+00> : vector<8x128xf32>
      %61 = tpu.matmul %59, %60, %cst_29 {dimension_numbers = #tpu.dot_dimension_numbers<[1], [0], [0], [1], [0, 0, 1, 1], [], []>} : vector<8x32xbf16>, vector<32x128xbf16>, vector<8x128xf32> -> vector<8x128xf32>
      %c0_30 = arith.constant 0 : index
      %c0_31 = arith.constant 0 : index
      %62 = vector.load %arg11[%c0_30, %c0_31] : memref<8x128xf32, #tpu.memory_space<vmem>>, vector<8x128xf32>
      tpu.vector_store %arg11[%c0_30, %c0_31], %61 {strides = array<i32>} : memref<8x128xf32, #tpu.memory_space<vmem>>, vector<8x128xf32>,
    } else {
    }
    %c0 = arith.constant 0 : index
    %c0_1 = arith.constant 0 : index
    %3 = vector.load %arg8[%c0, %c0_1] : memref<4x128xf32, #tpu.memory_space<vmem>>, vector<1x128xf32>
    %c1 = arith.constant 1 : index
    %c0_2 = arith.constant 0 : index
    %4 = vector.load %arg8[%c1, %c0_2] : memref<4x128xf32, #tpu.memory_space<vmem>>, vector<1x128xf32>
    %c2 = arith.constant 2 : index
    %c0_3 = arith.constant 0 : index
    %5 = vector.load %arg8[%c2, %c0_3] : memref<4x128xf32, #tpu.memory_space<vmem>>, vector<1x128xf32>
    %c3 = arith.constant 3 : index
    %c0_4 = arith.constant 0 : index
    %6 = vector.load %arg8[%c3, %c0_4] : memref<4x128xf32, #tpu.memory_space<vmem>>, vector<1x128xf32>
    %c0_5 = arith.constant 0 : index
    %c0_6 = arith.constant 0 : index
    %7 = vector.load %arg10[%c0_5, %c0_6] : memref<8x128xf32, #tpu.memory_space<vmem>>, vector<8x128xf32>
    %8 = arith.truncf %7 : vector<8x128xf32> to vector<8x128xbf16>
    %c0_7 = arith.constant 0 : index
    %c0_8 = arith.constant 0 : index
    %9 = vector.load %arg6[%c0_7, %c0_8] : memref<128x256xbf16, #tpu.memory_space<vmem>>, vector<128x256xbf16>
    %cst = arith.constant dense<0.000000e+00> : vector<8x256xf32>
    %10 = tpu.matmul %8, %9, %cst {dimension_numbers = #tpu.dot_dimension_numbers<[1], [0], [0], [1], [0, 0, 1, 1], [], []>} : vector<8x128xbf16>, vector<128x256xbf16>, vector<8x256xf32> -> vector<8x256xf32>
    %11 = arith.index_cast %arg1 : i32 to index
    %12 = memref.load %arg2[%11] : memref<1xf32, #tpu.memory_space<smem>>
    %13 = vector.extract_strided_slice %10 {offsets = [0, 0], sizes = [8, 128], strides = [1, 1]} : vector<8x256xf32> to vector<8x128xf32>
    %c0_9 = arith.constant 0 : index
    %c0_10 = arith.constant 0 : index
    %14 = vector.load %arg11[%c0_9, %c0_10] : memref<8x128xf32, #tpu.memory_space<vmem>>, vector<8x128xf32>
    %15 = vector.broadcast %12 : f32 to vector<8x128xf32>
    %16 = arith.mulf %15, %14 : vector<8x128xf32>
    %17 = arith.addf %13, %16 : vector<8x128xf32>
    %18 = vector.broadcast %3 : vector<1x128xf32> to vector<8x128xf32>
    %19 = arith.addf %17, %18 : vector<8x128xf32>
    %20 = vector.extract_strided_slice %10 {offsets = [0, 128], sizes = [8, 128], strides = [1, 1]} : vector<8x256xf32> to vector<8x128xf32>
    %cst_11 = arith.constant 5.000000e-01 : f32
    %21 = vector.broadcast %cst_11 : f32 to vector<8x128xf32>
    %22 = arith.mulf %21, %20 : vector<8x128xf32>
    %23 = math.tanh %22 : vector<8x128xf32>
    %cst_12 = arith.constant 5.000000e-01 : f32
    %24 = vector.broadcast %cst_12 : f32 to vector<8x128xf32>
    %25 = arith.mulf %24, %23 : vector<8x128xf32>
    %cst_13 = arith.constant 5.000000e-01 : f32
    %26 = vector.broadcast %cst_13 : f32 to vector<8x128xf32>
    %27 = arith.addf %25, %26 : vector<8x128xf32>
    %28 = math.tanh %19 : vector<8x128xf32>
    %29 = arith.mulf %27, %28 : vector<8x128xf32>
    %30 = arith.subf %29, %7 : vector<8x128xf32>
    %31 = vector.broadcast %4 : vector<1x128xf32> to vector<8x128xf32>
    %32 = arith.mulf %30, %31 : vector<8x128xf32>
    %cst_14 = arith.constant dense<0.000000e+00> : vector<8xf32>
    %33 = vector.multi_reduction <add>, %32, %cst_14 [1] : vector<8x128xf32> to vector<8xf32>
    %34 = vector.shape_cast %33 : vector<8xf32> to vector<8x1xf32>
    %35 = arith.mulf %32, %32 : vector<8x128xf32>
    %cst_15 = arith.constant dense<0.000000e+00> : vector<8xf32>
    %36 = vector.multi_reduction <add>, %35, %cst_15 [1] : vector<8x128xf32> to vector<8xf32>
    %37 = vector.shape_cast %36 : vector<8xf32> to vector<8x1xf32>
    %cst_16 = arith.constant 1.562500e-02 : f32
    %38 = vector.broadcast %cst_16 : f32 to vector<8x1xf32>
    %39 = arith.mulf %34, %38 : vector<8x1xf32>
    %cst_17 = arith.constant 1.562500e-02 : f32
    %40 = vector.broadcast %cst_17 : f32 to vector<8x1xf32>
    %41 = arith.mulf %37, %40 : vector<8x1xf32>
    %42 = arith.mulf %39, %39 : vector<8x1xf32>
    %43 = arith.subf %41, %42 : vector<8x1xf32>
    %cst_18 = arith.constant 9.99999974E-6 : f32
    %44 = vector.broadcast %cst_18 : f32 to vector<8x1xf32>
    %45 = arith.addf %43, %44 : vector<8x1xf32>
    %46 = math.rsqrt %45 : vector<8x1xf32>
    %47 = vector.broadcast %39 : vector<8x1xf32> to vector<8x128xf32>
    %48 = arith.subf %32, %47 : vector<8x128xf32>
    %49 = vector.broadcast %46 : vector<8x1xf32> to vector<8x128xf32>
    %50 = arith.mulf %48, %49 : vector<8x128xf32>
    %51 = vector.broadcast %5 : vector<1x128xf32> to vector<8x128xf32>
    %52 = arith.mulf %50, %51 : vector<8x128xf32>
    %53 = vector.broadcast %6 : vector<1x128xf32> to vector<8x128xf32>
    %54 = arith.addf %52, %53 : vector<8x128xf32>
    %c0_19 = arith.constant 0 : index
    %c0_20 = arith.constant 0 : index
    %55 = vector.load %arg9[%c0_19, %c0_20] : memref<8x128xf32, #tpu.memory_space<vmem>>, vector<8x128xf32>
    tpu.vector_store %arg9[%c0_19, %c0_20], %54 {strides = array<i32>} : memref<8x128xf32, #tpu.memory_space<vmem>>, vector<8x128xf32>,
    return
  }
  func.func @transform_0(%arg0: i32, %arg1: i32, %arg2: memref<1xf32, #tpu.memory_space<smem>>, %arg3: memref<1xf32, #tpu.memory_space<smem>>) -> (i32, i32) {
    %c0_i32 = arith.constant 0 : i32
    %c0_i32_0 = arith.constant 0 : i32
    return %arg0, %c0_i32 : i32, i32
  }
  func.func @transform_1(%arg0: i32, %arg1: i32, %arg2: memref<1xf32, #tpu.memory_space<smem>>, %arg3: memref<1xf32, #tpu.memory_space<smem>>) -> (i32, i32) {
    %c0_i32 = arith.constant 0 : i32
    %c0_i32_0 = arith.constant 0 : i32
    return %arg0, %c0_i32 : i32, i32
  }
  func.func @transform_2(%arg0: i32, %arg1: i32, %arg2: memref<1xf32, #tpu.memory_space<smem>>, %arg3: memref<1xf32, #tpu.memory_space<smem>>) -> (i32, i32) {
    %c0_i32 = arith.constant 0 : i32
    %c0_i32_0 = arith.constant 0 : i32
    %c0_i32_1 = arith.constant 0 : i32
    return %c0_i32, %c0_i32_0 : i32, i32
  }
  func.func @transform_3(%arg0: i32, %arg1: i32, %arg2: memref<1xf32, #tpu.memory_space<smem>>, %arg3: memref<1xf32, #tpu.memory_space<smem>>) -> (i32, i32) {
    %c0_i32 = arith.constant 0 : i32
    %c0_i32_0 = arith.constant 0 : i32
    %c0_i32_1 = arith.constant 0 : i32
    return %c0_i32, %c0_i32_0 : i32, i32
  }
  func.func @transform_4(%arg0: i32, %arg1: i32, %arg2: memref<1xf32, #tpu.memory_space<smem>>, %arg3: memref<1xf32, #tpu.memory_space<smem>>) -> (i32, i32) {
    %c0_i32 = arith.constant 0 : i32
    %c0_i32_0 = arith.constant 0 : i32
    %c0_i32_1 = arith.constant 0 : i32
    return %c0_i32, %c0_i32_0 : i32, i32
  }
  func.func @transform_5(%arg0: i32, %arg1: i32, %arg2: memref<1xf32, #tpu.memory_space<smem>>, %arg3: memref<1xf32, #tpu.memory_space<smem>>) -> (i32, i32) {
    %c0_i32 = arith.constant 0 : i32
    %c0_i32_0 = arith.constant 0 : i32
    return %arg0, %c0_i32 : i32, i32
  }
}

</mosaic_0001>

<llo_original>
// kernel: _lambda_.1
$region0: #{_lambda_.1}
  #allocation0 [shape = 'u32[]', space=smem, size = 0x4, offset = 0x4, fixed_abs, tag = 'smem constant byte address 0x4 - core index']
  #allocation1 [shape = 'u32[144,128]{1,0:T(1,128)}', space=vmem, size = 0x12000, scoped, tag = 'internal scratch']
  #allocation2 [shape = 'f32[8,128]{1,0:T(8,128)}', space=vmem, size = 0x1000, scoped, tag = 'scratch operand']
  #allocation3 [shape = 'f32[8,128]{1,0:T(8,128)}', space=vmem, size = 0x1000, scoped, tag = 'scratch operand']
  #allocation4 [shape = 's32[1]{0}', space=sflag, size = 0x4, scoped, tag = 'scoped memory for _lambda_.1']
  #allocation5 [shape = 'f32[1]{0:T(128)S(6)}', space=smem, size = 0x200, scoped, tag = 'prefetched SMEM operand 0']
  #allocation6 [shape = 'f32[1]{0:T(128)S(6)}', space=smem, size = 0x200, scoped, tag = 'prefetched SMEM operand 1']
  %s0 = inlined_call_operand.<no memory space> [shape: f32[1], index: 0, kind: input, shape index: {}]
  %s1 = inlined_call_operand.<no memory space> [shape: f32[1], index: 1, kind: input, shape index: {}]
  %s2 = inlined_call_operand.vmem [shape: f32[16,128], index: 2, kind: input, shape index: {}]
  %s3 = inlined_call_operand.vmem [shape: f32[16,32], index: 3, kind: input, shape index: {}]
  %s4 = inlined_call_operand.vmem [shape: bf16[128,256], index: 4, kind: input, shape index: {}]
  %s5 = inlined_call_operand.vmem [shape: bf16[32,128], index: 5, kind: input, shape index: {}]
  %s6 = inlined_call_operand.vmem [shape: f32[4,128], index: 6, kind: input, shape index: {}]
  %s7 = inlined_call_operand.hbm [shape: f32[16,128], index: 7, kind: output, shape index: {}]
  %s8 = sld [smem:[#allocation0]]
  $region57: #{_lambda_.1} parent=0
    _
  %s10 = ssub.s32 1, %s8
  %s11 = scalar_select 0, %s10, %s8
  %12 = sst [smem:[#allocation5]] %s0
  %13 = sst [smem:[#allocation6]] %s1
  $region1: #{_lambda_.1} parent=0
    #allocation7 [shape = 'u8[8192]{0}', space=vmem, size = 0x2000, scoped, tag = 'output window, operand 0']
    #allocation8 [shape = 's32[2]{0}', space=sflag, size = 0x8, scoped, tag = 'scoped memory for _lambda_.1']
    %14 = vsyncpa [#allocation8], 0
    %s15 = scalar_lea.sflag [#allocation8], 1
    %16 = vsyncpa %s15, 0
    loop: start=0, step=1, limit=4
    $region2: #{_lambda_.1} parent=1 // loop_pre_header
      _
    $region3: #{_lambda_.1} parent=1 // loop_header
      %s18 = sphi 0, %s22
      %p19 = scmp.ge.s32.totalorder %s18, 4
      %s25 = sphi 0, %s37
      %s26 = sphi 0, %s33
      %s27 = sphi 0, %s25
      %s28 = sphi 0, %s26
      %s29 = sphi 0, %s27
      %s30 = sphi 0, %s28
      %s40 = sphi 0, %s42
      %s43 = sphi 0, %s40
      %s44 = sphi 0, %s43
      %s60 = sphi 0, %s44
      %s66 = sphi 0, %s68
      %s69 = sphi 0, %s66
      %s70 = sphi 0, %s69
      %s86 = sphi 0, %s70
      %s90 = sphi 0, %s90
      %s92 = sphi 0, %s90
      %s93 = sphi 0, %s92
      %s107 = sphi 0, %s93
      %s111 = sphi 0, %s111
      %s113 = sphi 0, %s111
      %s114 = sphi 0, %s113
      %s128 = sphi 0, %s114
      %s132 = sphi 0, %s132
      %s134 = sphi 0, %s132
      %s135 = sphi 0, %s134
      %s149 = sphi 0, %s135
      %s155 = sphi 0, %s157
      %s158 = sphi 0, %s155
      %s159 = sphi 0, %s158
      %s175 = sphi 0, %s159
    $region4: #{_lambda_.1} parent=1 // loop_header_branch
      %21 = sbr.rel (%p19) target = $region8
    $region5: #{_lambda_.1} parent=1 // loop_body
      %s23 = ssub.s32 %s18, 1
      %s24 = ssub.s32 %s18, 2
      %s31 = sadd.s32 1, %s26
      %p32 = scmp.ge.s32.totalorder %s31, 1
      %s33 = scalar_select %p32, 0, %s31
      %s34 = sadd.s32 1, %s25
      %s35 = scalar_select %p32, %s34, %s25
      %p36 = scmp.ge.s32.totalorder %s35, 2
      %s37 = scalar_select %p36, 0, %s35
      %s38 = ssub.s32 %s25, %s37
      %p39 = scmp.eq.s32.totalorder %s38, 0
      %s41 = sadd.s32 %s40, 1
      %s42 = scalar_select %p39, %s40, %s41
      %p45 = pneg %p39
      %p46 = scmp.eq.s32.totalorder %s18, 1
      %p47 = por %p45, %p46
      %p48 = scmp.ne.s32.totalorder %s40, %s43
      %p49 = scmp.eq.s32.totalorder %s18, 0
      %p50 = por %p48, %p49
      %p51 = scmp.ne.s32.totalorder %s40, %s43
      %p52 = scmp.eq.s32.totalorder %s23, 1
      %p53 = por %p51, %p52
      %p54 = scmp.ne.s32.totalorder %s43, %s44
      %p55 = scmp.eq.s32.totalorder %s23, 0
      %p56 = por %p54, %p55
      %p57 = scmp.ne.s32.totalorder %s43, %s44
      %p58 = scmp.eq.s32.totalorder %s24, 1
      %p59 = por %p57, %p58
      %p61 = scmp.ne.s32.totalorder %s44, %s60
      %p62 = scmp.eq.s32.totalorder %s24, 0
      %p63 = por %p61, %p62
      %s64 = ssub.s32 %s25, %s37
      %p65 = scmp.eq.s32.totalorder %s64, 0
      %s67 = sadd.s32 %s66, 1
      %s68 = scalar_select %p65, %s66, %s67
      %p71 = pneg %p65
      %p72 = scmp.eq.s32.totalorder %s18, 1
      %p73 = por %p71, %p72
      %p74 = scmp.ne.s32.totalorder %s66, %s69
      %p75 = scmp.eq.s32.totalorder %s18, 0
      %p76 = por %p74, %p75
      %p77 = scmp.ne.s32.totalorder %s66, %s69
      %p78 = scmp.eq.s32.totalorder %s23, 1
      %p79 = por %p77, %p78
      %p80 = scmp.ne.s32.totalorder %s69, %s70
      %p81 = scmp.eq.s32.totalorder %s23, 0
      %p82 = por %p80, %p81
      %p83 = scmp.ne.s32.totalorder %s69, %s70
      %p84 = scmp.eq.s32.totalorder %s24, 1
      %p85 = por %p83, %p84
      %p87 = scmp.ne.s32.totalorder %s70, %s86
      %p88 = scmp.eq.s32.totalorder %s24, 0
      %p89 = por %p87, %p88
      %s91 = sadd.s32 %s90, 1
      %p94 = scmp.eq.s32.totalorder %s18, 1
      %p95 = scmp.ne.s32.totalorder %s90, %s92
      %p96 = scmp.eq.s32.totalorder %s18, 0
      %p97 = por %p95, %p96
      %p98 = scmp.ne.s32.totalorder %s90, %s92
      %p99 = scmp.eq.s32.totalorder %s23, 1
      %p100 = por %p98, %p99
      %p101 = scmp.ne.s32.totalorder %s92, %s93
      %p102 = scmp.eq.s32.totalorder %s23, 0
      %p103 = por %p101, %p102
      %p104 = scmp.ne.s32.totalorder %s92, %s93
      %p105 = scmp.eq.s32.totalorder %s24, 1
      %p106 = por %p104, %p105
      %p108 = scmp.ne.s32.totalorder %s93, %s107
      %p109 = scmp.eq.s32.totalorder %s24, 0
      %p110 = por %p108, %p109
      %s112 = sadd.s32 %s111, 1
      %p115 = scmp.eq.s32.totalorder %s18, 1
      %p116 = scmp.ne.s32.totalorder %s111, %s113
      %p117 = scmp.eq.s32.totalorder %s18, 0
      %p118 = por %p116, %p117
      %p119 = scmp.ne.s32.totalorder %s111, %s113
      %p120 = scmp.eq.s32.totalorder %s23, 1
      %p121 = por %p119, %p120
      %p122 = scmp.ne.s32.totalorder %s113, %s114
      %p123 = scmp.eq.s32.totalorder %s23, 0
      %p124 = por %p122, %p123
      %p125 = scmp.ne.s32.totalorder %s113, %s114
      %p126 = scmp.eq.s32.totalorder %s24, 1
      %p127 = por %p125, %p126
      %p129 = scmp.ne.s32.totalorder %s114, %s128
      %p130 = scmp.eq.s32.totalorder %s24, 0
      %p131 = por %p129, %p130
      %s133 = sadd.s32 %s132, 1
      %p136 = scmp.eq.s32.totalorder %s18, 1
      %p137 = scmp.ne.s32.totalorder %s132, %s134
      %p138 = scmp.eq.s32.totalorder %s18, 0
      %p139 = por %p137, %p138
      %p140 = scmp.ne.s32.totalorder %s132, %s134
      %p141 = scmp.eq.s32.totalorder %s23, 1
      %p142 = por %p140, %p141
      %p143 = scmp.ne.s32.totalorder %s134, %s135
      %p144 = scmp.eq.s32.totalorder %s23, 0
      %p145 = por %p143, %p144
      %p146 = scmp.ne.s32.totalorder %s134, %s135
      %p147 = scmp.eq.s32.totalorder %s24, 1
      %p148 = por %p146, %p147
      %p150 = scmp.ne.s32.totalorder %s135, %s149
      %p151 = scmp.eq.s32.totalorder %s24, 0
      %p152 = por %p150, %p151
      %s153 = ssub.s32 %s25, %s37
      %p154 = scmp.eq.s32.totalorder %s153, 0
      %s156 = sadd.s32 %s155, 1
      %s157 = scalar_select %p154, %s155, %s156
      %p160 = pneg %p154
      %p161 = scmp.eq.s32.totalorder %s18, 1
      %p162 = por %p160, %p161
      %p163 = scmp.ne.s32.totalorder %s155, %s158
      %p164 = scmp.eq.s32.totalorder %s18, 0
      %p165 = por %p163, %p164
      %p166 = scmp.ne.s32.totalorder %s155, %s158
      %p167 = scmp.eq.s32.totalorder %s23, 1
      %p168 = por %p166, %p167
      %p169 = scmp.ne.s32.totalorder %s158, %s159
      %p170 = scmp.eq.s32.totalorder %s23, 0
      %p171 = por %p169, %p170
      %p172 = scmp.ne.s32.totalorder %s158, %s159
      %p173 = scmp.eq.s32.totalorder %s24, 1
      %p174 = por %p172, %p173
      %p176 = scmp.ne.s32.totalorder %s159, %s175
      %p177 = scmp.eq.s32.totalorder %s24, 0
      %p178 = por %p176, %p177
      %p179 = scmp.le.s32.totalorder 1, %s18
      %p180 = scmp.lt.s32.totalorder %s18, 3
      %p181 = pnand %p179, %p180
      %p182 = pneg %p181
      // Predicated region
      $region9: #{_lambda_.1} parent=5 // pred_check
        _
      $region10: #{_lambda_.1} parent=5 // pred_check_branch
        %184 = sbr.rel (%p181) target = $region12
      $region11: #{_lambda_.1} parent=5 // pred_region
        %s185 = ssub.s32 %s18, 1
        // Predicated region
        $region13: #{_lambda_.1} parent=11 // pred_check
          %p186 = pneg %p103
        $region14: #{_lambda_.1} parent=11 // pred_check_branch
          %188 = sbr.rel (%p186) target = $region16
        $region15: #{_lambda_.1} parent=11 // pred_region
          _
        $region16: #{_lambda_.1} parent=11 // pred_fallthru
          _
        // Predicated region
        $region17: #{_lambda_.1} parent=11 // pred_check
          %p189 = pneg %p124
        $region18: #{_lambda_.1} parent=11 // pred_check_branch
          %191 = sbr.rel (%p189) target = $region20
        $region19: #{_lambda_.1} parent=11 // pred_region
          _
        $region20: #{_lambda_.1} parent=11 // pred_fallthru
          _
        // Predicated region
        $region21: #{_lambda_.1} parent=11 // pred_check
          %p192 = pneg %p145
        $region22: #{_lambda_.1} parent=11 // pred_check_branch
          %194 = sbr.rel (%p192) target = $region24
        $region23: #{_lambda_.1} parent=11 // pred_region
          _
        $region24: #{_lambda_.1} parent=11 // pred_fallthru
          _
      $region12: #{_lambda_.1} parent=5 // pred_fallthru
        _
      %p195 = scmp.lt.s32.totalorder %s18, 2
      // Predicated region
      $region25: #{_lambda_.1} parent=5 // pred_check
        %p196 = pneg %p195
      $region26: #{_lambda_.1} parent=5 // pred_check_branch
        %198 = sbr.rel (%p196) target = $region28
      $region27: #{_lambda_.1} parent=5 // pred_region
        // Predicated region
        $region29: #{_lambda_.1} parent=27 // pred_check
          %p199 = pneg %p50
        $region30: #{_lambda_.1} parent=27 // pred_check_branch
          %201 = sbr.rel (%p199) target = $region32
        $region31: #{_lambda_.1} parent=27 // pred_region
          %p202 = scmp.lt.s32.totalorder %s25, 1
          %s203 = scalar_select %p202, %s25, 1
          %s204 = smul.addr %s203, 8
          %s205 = scalar_lea.vmem %s2, %s204
        $region32: #{_lambda_.1} parent=27 // pred_fallthru
          _
        // Predicated region
        $region33: #{_lambda_.1} parent=27 // pred_check
          %p206 = pneg %p76
        $region34: #{_lambda_.1} parent=27 // pred_check_branch
          %208 = sbr.rel (%p206) target = $region36
        $region35: #{_lambda_.1} parent=27 // pred_region
          %p209 = scmp.lt.s32.totalorder %s25, 1
          %s210 = scalar_select %p209, %s25, 1
          %s211 = smul.addr %s210, 8
          %s212 = scalar_lea.vmem %s3, %s211
        $region36: #{_lambda_.1} parent=27 // pred_fallthru
          _
      $region28: #{_lambda_.1} parent=5 // pred_fallthru
        _
      %p213 = scmp.le.s32.totalorder 1, %s18
      %p214 = scmp.lt.s32.totalorder %s18, 3
      %p215 = pnand %p213, %p214
      %p216 = pneg %p215
      // Predicated region
      $region37: #{_lambda_.1} parent=5 // pred_check
        _
      $region38: #{_lambda_.1} parent=5 // pred_check_branch
        %218 = sbr.rel (%p215) target = $region40
      $region39: #{_lambda_.1} parent=5 // pred_region
        %s219 = ssub.s32 %s18, 1
        %p220 = scmp.lt.s32.totalorder %s27, 1
        %s221 = scalar_select %p220, %s27, 1
        %s222 = smul.addr %s221, 8
        %s223 = scalar_lea.vmem %s2, %s222
        %p224 = pneg %p56
        %p225 = pneg %p53
        %p226 = scmp.lt.s32.totalorder %s27, 1
        %s227 = scalar_select %p226, %s27, 1
        %s228 = smul.addr %s227, 8
        %s229 = scalar_lea.vmem %s3, %s228
        %p230 = pneg %p82
        %p231 = pneg %p79
        %p232 = pneg %p103
        %p233 = pneg %p100
        %p234 = pneg %p124
        %p235 = pneg %p121
        %p236 = pneg %p145
        %p237 = pneg %p142
        %p238 = pneg %p171
        %p239 = pneg %p168
        %s240 = sand.u32 %s158, 1
        %s241 = scalar_lea.sflag [#allocation8], %s240
        %s242 = sand.u32 %s158, 1
        %s243 = smul.addr %s242, 8
        %s244 = scalar_lea.vmem [#allocation7], %s243
        %p245 = scmp.lt.s32.totalorder %s27, 1
        %s246 = scalar_select %p245, %s27, 1
        %s247 = smul.addr %s246, 8
        %s248 = scalar_lea.vmem %s2, %s247
        %p249 = scmp.lt.s32.totalorder %s27, 1
        %s250 = scalar_select %p249, %s27, 1
        %s251 = smul.addr %s250, 8
        %s252 = scalar_lea.vmem %s3, %s251
        %p254 = scmp.eq.s32.totalorder %s28, 0
        // Predicated region
        $region41: #{_lambda_.1} parent=39 // pred_check
          %p255 = pneg %p254
        $region42: #{_lambda_.1} parent=39 // pred_check_branch
          %257 = sbr.rel (%p255) target = $region44
        $region43: #{_lambda_.1} parent=39 // pred_region
          %v258 = vld [vmem:[%s248] sm:$0xff]
          %259 = vst [vmem:[#allocation2] sm:$0xff] %v258
          %v260 = vld [vmem:[%s252] sm:$0xff]
          %v261 = vpack.c.bf16 %v260, %v260
          %v262 = vld [vmem:[%s5] sm:$0xf]
          %v263 = vld [vmem:[%s5 + $0x4] sm:$0xf]
          %v264 = vld [vmem:[%s5 + $0x8] sm:$0xf]
          %v265 = vld [vmem:[%s5 + $0xc] sm:$0xf]
          %v270 = vunpack.c.l.b16 %v262
          %v271 = vunpack.c.l.b16 %v263
          %v272 = vunpack.c.l.b16 %v264
          %v273 = vunpack.c.l.b16 %v265
          %v274 = vpack.c.b16 %v271, %v270
          %v275 = vpack.c.b16 %v273, %v272
          %vm278 = vcmask 261120
          %v280 = vsel %vm278, %v261, 0
          %282 = vmatprep.subr.bf16.mxu0 0
          %283 = vmatpush1.bf16.msra.mxu0 %v274
          %284 = vmatprep.subr.bf16.mxu0 0
          %285 = vmatpush1.bf16.msra.mxu0 %v275
          %286 = vmatprep.subr.bf16.mxu0 0
          %287 = vmatpush1.bf16.msra.mxu0 0
          %288 = vmatprep.subr.bf16.mxu0 0
          %289 = vmatpush1.bf16.msra.mxu0 0
          %290 = vmatprep.subr.bf16.mxu0 0
          %291 = vmatpush1.bf16.msra.mxu0 0
          %292 = vmatprep.subr.bf16.mxu0 0
          %293 = vmatpush1.bf16.msra.mxu0 0
          %294 = vmatprep.subr.bf16.mxu0 0
          %295 = vmatpush1.bf16.msra.mxu0 0
          %296 = vmatprep.subr.bf16.mxu0 0
          %297 = vmatpush1.bf16.msra.mxu0 0
          %298 = vmatprep.subr.bf16.mxu0 0
          %299 = vmatpush1.bf16.msra.mxu0 0
          %300 = vmatprep.subr.bf16.mxu0 0
          %301 = vmatpush1.bf16.msra.mxu0 0
          %302 = vmatprep.subr.bf16.mxu0 0
          %303 = vmatpush1.bf16.msra.mxu0 0
          %304 = vmatprep.subr.bf16.mxu0 0
          %305 = vmatpush1.bf16.msra.mxu0 0
          %306 = vmatprep.subr.bf16.mxu0 0
          %307 = vmatpush1.bf16.msra.mxu0 0
          %308 = vmatprep.subr.bf16.mxu0 0
          %309 = vmatpush1.bf16.msra.mxu0 0
          %310 = vmatprep.subr.bf16.mxu0 0
          %311 = vmatpush1.bf16.msra.mxu0 0
          %312 = vmatprep.subr.bf16.mxu0 0
          %313 = vmatpush1.bf16.msra.mxu0 0
          %314 = vmatprep.mubr.bf16.mxu0 0
          %315 = vmatmul.mubr.bf16.gmra.mrb[0].mxu0 %v280
          %v316 = vpop.f32.mrb[0].mxu0
          %v317 = vadd.f32 0.0, %v316
          %v318 = vpop.f32.mrb[0].mxu0
          %v319 = vpop.f32.mrb[0].mxu0
          %v320 = vpop.f32.mrb[0].mxu0
          %321 = vdwg.mxu0
          %322 = vst [vmem:[#allocation3] sm:$0xff] %v317
        $region44: #{_lambda_.1} parent=39 // pred_fallthru
          _
        %v323 = vld [vmem:[%s6] sm:$0x1]
        %v324 = vld [vmem:[%s6 + $0x1] sm:$0x1]
        %v325 = vld [vmem:[%s6 + $0x2] sm:$0x1]
        %v326 = vld [vmem:[%s6 + $0x3] sm:$0x1]
        %v327 = vld [vmem:[#allocation2] sm:$0xff]
        %v328 = vpack.c.bf16 %v327, %v327
        %v329 = vld [vmem:[%s4] sm:$0xff]
        %v330 = vld [vmem:[%s4 + $0x8] sm:$0xff]
        %v331 = vld [vmem:[%s4 + $0x10] sm:$0xff]
        %v332 = vld [vmem:[%s4 + $0x18] sm:$0xff]
        %v333 = vld [vmem:[%s4 + $0x20] sm:$0xff]
        %v334 = vld [vmem:[%s4 + $0x28] sm:$0xff]
        %v335 = vld [vmem:[%s4 + $0x30] sm:$0xff]
        %v336 = vld [vmem:[%s4 + $0x38] sm:$0xff]
        %v337 = vld [vmem:[%s4 + $0x40] sm:$0xff]
        %v338 = vld [vmem:[%s4 + $0x48] sm:$0xff]
        %v339 = vld [vmem:[%s4 + $0x50] sm:$0xff]
        %v340 = vld [vmem:[%s4 + $0x58] sm:$0xff]
        %v341 = vld [vmem:[%s4 + $0x60] sm:$0xff]
        %v342 = vld [vmem:[%s4 + $0x68] sm:$0xff]
        %v343 = vld [vmem:[%s4 + $0x70] sm:$0xff]
        %v344 = vld [vmem:[%s4 + $0x78] sm:$0xff]
        %v361 = vunpack.c.l.b16 %v329
        %v362 = vunpack.c.h.b16 %v329
        %v363 = vunpack.c.l.b16 %v330
        %v364 = vunpack.c.h.b16 %v330
        %v365 = vunpack.c.l.b16 %v331
        %v366 = vunpack.c.h.b16 %v331
        %v367 = vunpack.c.l.b16 %v332
        %v368 = vunpack.c.h.b16 %v332
        %v369 = vunpack.c.l.b16 %v333
        %v370 = vunpack.c.h.b16 %v333
        %v371 = vunpack.c.l.b16 %v334
        %v372 = vunpack.c.h.b16 %v334
        %v373 = vunpack.c.l.b16 %v335
        %v374 = vunpack.c.h.b16 %v335
        %v375 = vunpack.c.l.b16 %v336
        %v376 = vunpack.c.h.b16 %v336
        %v377 = vunpack.c.l.b16 %v337
        %v378 = vunpack.c.h.b16 %v337
        %v379 = vunpack.c.l.b16 %v338
        %v380 = vunpack.c.h.b16 %v338
        %v381 = vunpack.c.l.b16 %v339
        %v382 = vunpack.c.h.b16 %v339
        %v383 = vunpack.c.l.b16 %v340
        %v384 = vunpack.c.h.b16 %v340
        %v385 = vunpack.c.l.b16 %v341
        %v386 = vunpack.c.h.b16 %v341
        %v387 = vunpack.c.l.b16 %v342
        %v388 = vunpack.c.h.b16 %v342
        %v389 = vunpack.c.l.b16 %v343
        %v390 = vunpack.c.h.b16 %v343
        %v391 = vunpack.c.l.b16 %v344
        %v392 = vunpack.c.h.b16 %v344
        %v393 = vpack.c.b16 %v363, %v361
        %v394 = vpack.c.b16 %v364, %v362
        %v395 = vpack.c.b16 %v367, %v365
        %v396 = vpack.c.b16 %v368, %v366
        %v397 = vpack.c.b16 %v371, %v369
        %v398 = vpack.c.b16 %v372, %v370
        %v399 = vpack.c.b16 %v375, %v373
        %v400 = vpack.c.b16 %v376, %v374
        %v401 = vpack.c.b16 %v379, %v377
        %v402 = vpack.c.b16 %v380, %v378
        %v403 = vpack.c.b16 %v383, %v381
        %v404 = vpack.c.b16 %v384, %v382
        %v405 = vpack.c.b16 %v387, %v385
        %v406 = vpack.c.b16 %v388, %v386
        %v407 = vpack.c.b16 %v391, %v389
        %v408 = vpack.c.b16 %v392, %v390
        %425 = vmatprep.subr.bf16.mxu0 %v394
        %426 = vmatpush1.bf16.msra.mxu0 %v393
        %427 = vmatprep.subr.bf16.mxu0 %v396
        %428 = vmatpush1.bf16.msra.mxu0 %v395
        %429 = vmatprep.subr.bf16.mxu0 %v398
        %430 = vmatpush1.bf16.msra.mxu0 %v397
        %431 = vmatprep.subr.bf16.mxu0 %v400
        %432 = vmatpush1.bf16.msra.mxu0 %v399
        %433 = vmatprep.subr.bf16.mxu0 %v402
        %434 = vmatpush1.bf16.msra.mxu0 %v401
        %435 = vmatprep.subr.bf16.mxu0 %v404
        %436 = vmatpush1.bf16.msra.mxu0 %v403
        %437 = vmatprep.subr.bf16.mxu0 %v406
        %438 = vmatpush1.bf16.msra.mxu0 %v405
        %439 = vmatprep.subr.bf16.mxu0 %v408
        %440 = vmatpush1.bf16.msra.mxu0 %v407
        %441 = vmatprep.subr.bf16.mxu0 0
        %442 = vmatpush1.bf16.msra.mxu0 0
        %443 = vmatprep.subr.bf16.mxu0 0
        %444 = vmatpush1.bf16.msra.mxu0 0
        %445 = vmatprep.subr.bf16.mxu0 0
        %446 = vmatpush1.bf16.msra.mxu0 0
        %447 = vmatprep.subr.bf16.mxu0 0
        %448 = vmatpush1.bf16.msra.mxu0 0
        %449 = vmatprep.subr.bf16.mxu0 0
        %450 = vmatpush1.bf16.msra.mxu0 0
        %451 = vmatprep.subr.bf16.mxu0 0
        %452 = vmatpush1.bf16.msra.mxu0 0
        %453 = vmatprep.subr.bf16.mxu0 0
        %454 = vmatpush1.bf16.msra.mxu0 0
        %455 = vmatprep.subr.bf16.mxu0 0
        %456 = vmatpush1.bf16.msra.mxu0 0
        %457 = vmatprep.mubr.bf16.mxu0 0
        %458 = vmatmul.mubr.bf16.gmra.mrb[0].mxu0 %v328
        %v459 = vpop.f32.mrb[0].mxu0
        %v460 = vadd.f32 0.0, %v459
        %v461 = vpop.f32.mrb[0].mxu0
        %v462 = vadd.f32 0.0, %v461
        %v463 = vpop.f32.mrb[0].mxu0
        %v464 = vpop.f32.mrb[0].mxu0
        %465 = vdwg.mxu0
        %s466 = sld [smem:[#allocation5 + %s28]]
        %v467 = vld [vmem:[#allocation3] sm:$0xff]
        %v468 = vstv %s466
        %v469 = vmul.f32 %v468, %v467
        %v470 = vadd.f32 %v460, %v469
        %v471 = vlaneseq
        %v472 = vshrl.u32 %v471, 7
        %v473 = vsub.s32 0, %v472
        %v474 = vrot.slane %v323, %v473
        %v475 = vadd.f32 %v470, %v474
        %v476 = vmul.f32 %v462, 0.5
        %v477 = vtanh.pop %v476
        %v478 = vmul.f32 %v477, 0.5
        %v479 = vadd.f32 %v478, 0.5
        %v480 = vtanh.pop %v475
        %v481 = vmul.f32 %v479, %v480
        %v482 = vsub.f32 %v481, %v327
        %v483 = vlaneseq
        %v484 = vshrl.u32 %v483, 7
        %v485 = vsub.s32 0, %v484
        %v486 = vrot.slane %v324, %v485
        %v487 = vmul.f32 %v482, %v486
        %488 = vadd.xlane.f32.xlu0 %v487
        %v489 = vpop.xlane.xlu0 %488
        %v490 = vmul.f32 %v487, %v487
        %491 = vadd.xlane.f32.xlu0 %v490
        %v492 = vpop.xlane.xlu0 %491
        %v493 = vmul.f32 %v489, 0.015625
        %v494 = vmul.f32 %v492, 0.015625
        %v495 = vmul.f32 %v493, %v493
        %v496 = vsub.f32 %v494, %v495
        %v497 = vadd.f32 %v496, 1e-05
        %v498 = vrsqrt.pop %v497
        %v499 = vsub.f32 %v487, %v493
        %v500 = vmul.f32 %v499, %v498
        %v501 = vlaneseq
        %v502 = vshrl.u32 %v501, 7
        %v503 = vsub.s32 0, %v502
        %v504 = vrot.slane %v325, %v503
        %v505 = vmul.f32 %v500, %v504
        %v506 = vlaneseq
        %v507 = vshrl.u32 %v506, 7
        %v508 = vsub.s32 0, %v507
        %v509 = vrot.slane %v326, %v508
        %v510 = vadd.f32 %v505, %v509
        %511 = vst [vmem:[%s244] sm:$0xff] %v510
        %s512 = sand.u32 %s158, 1
        %s513 = scalar_lea.sflag [#allocation8], %s512
        %s514 = sand.u32 %s158, 1
        %s515 = smul.addr %s514, 8
        %s516 = scalar_lea.vmem [#allocation7], %s515
        // Predicated region
        $region45: #{_lambda_.1} parent=39 // pred_check
          %p517 = pneg %p168
        $region46: #{_lambda_.1} parent=39 // pred_check_branch
          %519 = sbr.rel (%p517) target = $region48
        $region47: #{_lambda_.1} parent=39 // pred_region
          %s521 = ssub.s32 128, 128
          %522 = vsyncadd %s513, %s521
          %s523 = smul.addr %s27, 128
          %s524 = scalar_lea.hbm %s7, %s523
          %s526 = sshll.u32 %s516, 4
          %s527 = int_to_ptr.vmem [resolvable:$true] %s526
          %529 = dma.vmem_to_hbm [thread:$0]  %s527, 128, %s524, %s513
        $region48: #{_lambda_.1} parent=39 // pred_fallthru
          _
      $region40: #{_lambda_.1} parent=5 // pred_fallthru
        _
      %p530 = scmp.le.s32.totalorder 2, %s18
      // Predicated region
      $region49: #{_lambda_.1} parent=5 // pred_check
        %p531 = pneg %p530
      $region50: #{_lambda_.1} parent=5 // pred_check_branch
        %533 = sbr.rel (%p531) target = $region52
      $region51: #{_lambda_.1} parent=5 // pred_region
        %s534 = ssub.s32 %s18, 2
        // Predicated region
        $region53: #{_lambda_.1} parent=51 // pred_check
          %p535 = pneg %p174
        $region54: #{_lambda_.1} parent=51 // pred_check_branch
          %537 = sbr.rel (%p535) target = $region56
        $region55: #{_lambda_.1} parent=51 // pred_region
          %s538 = sand.u32 %s159, 1
          %s539 = scalar_lea.sflag [#allocation8], %s538
          %s540 = sand.u32 %s159, 1
          %s541 = smul.addr %s540, 8
          %s542 = scalar_lea.vmem [#allocation7], %s541
          %543 = dma.done %s539, 128
        $region56: #{_lambda_.1} parent=51 // pred_fallthru
          _
      $region52: #{_lambda_.1} parent=5 // pred_fallthru
        _
    $region6: #{_lambda_.1} parent=1 // loop_footer
      %s22 = sadd.s32 1, %s18
    $region7: #{_lambda_.1} parent=1 // loop_footer_branch
      %17 = sbr.rel target = $region3
    $region8: #{_lambda_.1} parent=1 // loop_exit
      _
    %544 = vsyncpa [#allocation8], 1
    %s545 = scalar_lea.sflag [#allocation8], 1
    %546 = vsyncpa %s545, 1

</llo_original>
